<compile_context>
chip_gen: v7x
topology: tpu7x:2x2x1
jax: 0.10.0
libtpu: 0.0.40
codegen_flags: <defaults>
</compile_context>

<pallas_src>
import math

import jax
import jax.numpy as jnp
from jax.experimental import pallas as pl
from jax.experimental.pallas import tpu as pltpu


def _layer_scale_kernel(x_ref, gamma_ref, o_ref):
    # Pure VPU broadcast-multiply. gamma is a single resident (1, W) VMEM tile
    # (constant index_map -> not re-DMA'd per grid step) already in x.dtype.
    o_ref[...] = (x_ref[...] * gamma_ref[...]).astype(o_ref.dtype)


def _fold_factor(D, rows, target_width=1024):
    """Fold factor k so the folded lane width k*D is a multiple of 128.

    Only returns k > 1 when the fold is a *free* reshape (k divides rows), so
    no padded copy of x is ever materialized. Widened toward ~target_width.
    """
    if rows == 0 or D % 128 == 0:
        return 1
    k = 128 // math.gcd(D, 128)
    if rows % k != 0:
        return 1  # folding would require a padded HBM copy of x -> skip
    while (k * 2 * D <= target_width) and (rows % (k * 2) == 0):
        k *= 2
    return k


def _round_up(n, m):
    return -(-n // m) * m


def layer_scale(x, gamma, *, target_block_bytes=None):
    """LayerScale forward: x * gamma, gamma broadcast along the last dim.

    x: [..., D], gamma: [D]
    """
    orig_shape = x.shape
    D = orig_shape[-1]
    assert gamma.shape == (D,), f"gamma must be ({D},), got {gamma.shape}"
    assert jnp.issubdtype(x.dtype, jnp.floating), (
        "layer_scale expects a floating-point x (LayerScale is float-only)")

    if x.size == 0:
        return x  # nothing to do for zero-element inputs

    out_dtype = x.dtype
    itemsize = jnp.dtype(out_dtype).itemsize
    # Minimum second-to-last block dim per dtype packing (f32:8, bf16:16, fp8/i8:32).
    min_rows = {4: 8, 2: 16, 1: 32}.get(itemsize, 8)

    rows = 1
    for s in orig_shape[:-1]:
        rows *= s

    # Per-generation sizing from physical VMEM (64 MiB on v7x, 128 MiB on v5e/v6e).
    try:
        vmem_cap = int(pltpu.get_tpu_info().vmem_capacity_bytes)
    except Exception:
        vmem_cap = 64 << 20  # conservative fallback (v7x-sized)
    if target_block_bytes is None:
        # ~8 MiB blocks on 128 MiB parts, ~5.3 MiB on 64 MiB parts.
        target_block_bytes = max(2 << 20, min(8 << 20, vmem_cap // 12))

    # 1) Lane-dense fold (only when it is a free reshape): [rows, D] -> [rows_f, W],
    #    W = k*D a multiple of 128 -> unmasked vector stores.
    k = _fold_factor(D, rows)
    W = k * D
    rows_f = rows // k
    x_f = x.reshape(rows_f, W)
    gamma_f = jnp.tile(gamma, k).astype(out_dtype).reshape(1, W)

    # 2) Row tile sized for ~target_block_bytes per block. No padding: the grid
    #    uses cdiv and Pallas masks the ragged last block's writes.
    max_tile = max(min_rows, target_block_bytes // (W * itemsize))
    if rows_f > max_tile:
        tile_rows = (max_tile // min_rows) * min_rows
    elif rows_f >= 2 * min_rows:
        # Force >=2 grid steps so both v7x TensorCores get work.
        tile_rows = _round_up(-(-rows_f // 2), min_rows)
    else:
        tile_rows = rows_f  # full extent: OK even if not a multiple of min_rows

    grid = (pl.cdiv(rows_f, tile_rows),)

    block_bytes = tile_rows * W * itemsize
    # x + out blocks each double-buffered (4 blocks) + resident gamma + slack,
    # capped at ~70% of physical VMEM.
    needed = 4 * block_bytes + 2 * W * itemsize + (1 << 20)
    vmem_bytes = int(min(0.7 * vmem_cap, max(16 << 20, needed)))

    cost = pl.CostEstimate(
        flops=rows * D,
        transcendentals=0,
        bytes_accessed=2 * rows * D * itemsize + D * itemsize,
    )

    out_f = pl.pallas_call(
        _layer_scale_kernel,
        out_shape=jax.ShapeDtypeStruct((rows_f, W), out_dtype),
        grid_spec=pltpu.PrefetchScalarGridSpec(
            num_scalar_prefetch=0,
            grid=grid,
            in_specs=[
                pl.BlockSpec((tile_rows, W), lambda i: (i, 0)),
                pl.BlockSpec((1, W), lambda i: (0, 0)),
            ],
            out_specs=pl.BlockSpec((tile_rows, W), lambda i: (i, 0)),
        ),
        compiler_params=pltpu.CompilerParams(
            dimension_semantics=("parallel",),
            vmem_limit_bytes=vmem_bytes,
        ),
        cost_estimate=cost,
    )(x_f, gamma_f)

    # Free metadata reshape back to the original shape (no slicing, no copies).
    return out_f.reshape(orig_shape)


if __name__ == "__main__":
    key = jax.random.PRNGKey(0)
    init_values = 1e-05

    # Primary test: shapes consistent with the module (batch=2, tokens=8, dim=32).
    B, N, D = 2, 8, 32
    kx, kx2, kx3 = jax.random.split(key, 3)
    x = jax.random.normal(kx, (B, N, D), dtype=jnp.float32)
    # nn.Parameter(torch.ones(dim)) scaled by init_values (DINO convention).
    gamma = jnp.ones((D,), dtype=jnp.float32) * init_values

    out = layer_scale(x, gamma)
    jax.block_until_ready(out)
    ref = x * gamma
    assert out.shape == x.shape and out.dtype == x.dtype
    assert jnp.allclose(out, ref, atol=1e-6, rtol=1e-6)

    # Secondary test: non-divisible rows / narrow last dim -> no fold, 2-step
    # grid with a partial (masked) last block, no host pad or output slice.
    B2, N2, D2 = 3, 7, 48
    x2 = jax.random.normal(kx2, (B2, N2, D2), dtype=jnp.float32)
    gamma2 = jnp.ones((D2,), dtype=jnp.float32) * init_values
    out2 = layer_scale(x2, gamma2)
    jax.block_until_ready(out2)
    assert jnp.allclose(out2, x2 * gamma2, atol=1e-6, rtol=1e-6)

    # Third test: bf16 x with lane-dense D (multiple of 128) -> gamma cast path.
    B3, N3, D3 = 2, 8, 128
    x3 = jax.random.normal(kx3, (B3, N3, D3), dtype=jnp.bfloat16)
    gamma3 = jnp.ones((D3,), dtype=jnp.float32) * init_values
    out3 = layer_scale(x3, gamma3)
    jax.block_until_ready(out3)
    ref3 = x3.astype(jnp.float32) * gamma3
    assert jnp.allclose(out3.astype(jnp.float32), ref3, rtol=5e-2, atol=1e-8)

    print("KERNEL_OK")
</pallas_src>

<mosaic_0001>
module attributes {stable_mosaic.version = 11 : i64} {
  func.func @_layer_scale_kernel(%arg0: i32, %arg1: memref<1x512xf32, #tpu.memory_space<vmem>>, %arg2: memref<1x512xf32, #tpu.memory_space<vmem>>, %arg3: memref<1x512xf32, #tpu.memory_space<vmem>>) attributes {dimension_semantics = [#tpu.dimension_semantics<parallel>], iteration_bounds = array<i64: 1>, scalar_prefetch = 0 : i64, scratch_operands = 0 : i64, tpu.core_type = #tpu.core_type<tc>, window_params = [{transform_indices = @transform_0, window_bounds = array<i64: 1, 512>}, {pipeline_mode = #tpu.pipeline_mode<synchronous>, transform_indices = @transform_1, window_bounds = array<i64: 1, 512>}, {transform_indices = @transform_2, window_bounds = array<i64: 1, 512>}]} {
    %c0 = arith.constant 0 : index
    %c0_0 = arith.constant 0 : index
    %0 = vector.load %arg1[%c0, %c0_0] : memref<1x512xf32, #tpu.memory_space<vmem>>, vector<1x512xf32>
    %c0_1 = arith.constant 0 : index
    %c0_2 = arith.constant 0 : index
    %1 = vector.load %arg2[%c0_1, %c0_2] : memref<1x512xf32, #tpu.memory_space<vmem>>, vector<1x512xf32>
    %2 = arith.mulf %0, %1 : vector<1x512xf32>
    %c0_3 = arith.constant 0 : index
    %c0_4 = arith.constant 0 : index
    %3 = vector.load %arg3[%c0_3, %c0_4] : memref<1x512xf32, #tpu.memory_space<vmem>>, vector<1x512xf32>
    tpu.vector_store %arg3[%c0_3, %c0_4], %2 {strides = array<i32>} : memref<1x512xf32, #tpu.memory_space<vmem>>, vector<1x512xf32>,
    return
  }
  func.func @transform_0(%arg0: i32) -> (i32, i32) {
    %c0_i32 = arith.constant 0 : i32
    %c0_i32_0 = arith.constant 0 : i32
    return %arg0, %c0_i32 : i32, i32
  }
  func.func @transform_1(%arg0: i32) -> (i32, i32) {
    %c0_i32 = arith.constant 0 : i32
    %c0_i32_0 = arith.constant 0 : i32
    %c0_i32_1 = arith.constant 0 : i32
    return %c0_i32, %c0_i32_0 : i32, i32
  }
  func.func @transform_2(%arg0: i32) -> (i32, i32) {
    %c0_i32 = arith.constant 0 : i32
    %c0_i32_0 = arith.constant 0 : i32
    return %arg0, %c0_i32 : i32, i32
  }
}

</mosaic_0001>

<llo_original>
// kernel: tpu_custom_call.1
$region0: #{tpu_custom_call.1}
  #allocation0 [shape = 'u32[]', space=smem, size = 0x4, offset = 0x4, fixed_abs, tag = 'smem constant byte address 0x4 - core index']
  #allocation1 [shape = 'u32[144,128]{1,0:T(1,128)}', space=vmem, size = 0x12000, scoped, tag = 'internal scratch']
  %s0 = inlined_call_operand.hbm [shape: f32[1,512], index: 0, kind: input, shape index: {}]
  %s1 = inlined_call_operand.hbm [shape: f32[1,512], index: 1, kind: input, shape index: {}]
  %s2 = inlined_call_operand.hbm [shape: f32[1,512], index: 2, kind: output, shape index: {}]
  %s3 = sld [smem:[#allocation0]]
  $region26: #{tpu_custom_call.1} parent=0
    _
  %s5 = ssub.s32 1, %s3
  %s6 = scalar_select 0, %s5, %s3
  $region1: #{tpu_custom_call.1} parent=0
    #allocation2 [shape = 'u8[2048]{0}', space=vmem, size = 0x800, scoped, tag = 'input window, operand 0, single buffered']
    #allocation3 [shape = 's32[1]{0}', space=sflag, size = 0x4, scoped, tag = 'scoped memory for tpu_custom_call.1']
    #allocation4 [shape = 's32[1]{0}', space=sflag, size = 0x4, scoped, tag = 'scoped memory for tpu_custom_call.1']
    #allocation5 [shape = 'u8[2048]{0}', space=vmem, size = 0x800, scoped, tag = 'input window, operand 1, single buffered']
    #allocation6 [shape = 's32[1]{0}', space=sflag, size = 0x4, scoped, tag = 'scoped memory for tpu_custom_call.1']
    #allocation7 [shape = 'u8[2048]{0}', space=vmem, size = 0x800, scoped, tag = 'output window, operand 0, single buffered']
    %7 = vsyncpa [#allocation3], 0
    %8 = vsyncpa [#allocation6], 0
    %9 = vsyncpa [#allocation4], 0
    // Predicated region
    $region2: #{tpu_custom_call.1} parent=1 // pred_check
      _
    $region3: #{tpu_custom_call.1} parent=1 // pred_check_branch
      %11 = sbr.rel (0) target = $region5
    $region4: #{tpu_custom_call.1} parent=1 // pred_region
      %s13 = ssub.s32 64, 64
      %14 = vsyncadd [#allocation3], %s13
      %s16 = sshll.u32 [#allocation2], 4
      %s17 = int_to_ptr.vmem [resolvable:$true] %s16
      %19 = dma.hbm_to_vmem [thread:$0]  %s0, 64, %s17, [#allocation3]
    $region5: #{tpu_custom_call.1} parent=1 // pred_fallthru
      _
    // Predicated region
    $region6: #{tpu_custom_call.1} parent=1 // pred_check
      _
    $region7: #{tpu_custom_call.1} parent=1 // pred_check_branch
      %21 = sbr.rel (0) target = $region9
    $region8: #{tpu_custom_call.1} parent=1 // pred_region
      %s23 = ssub.s32 64, 64
      %24 = vsyncadd [#allocation6], %s23
      %s26 = sshll.u32 [#allocation5], 4
      %s27 = int_to_ptr.vmem [resolvable:$true] %s26
      %29 = dma.hbm_to_vmem [thread:$0]  %s1, 64, %s27, [#allocation6]
    $region9: #{tpu_custom_call.1} parent=1 // pred_fallthru
      _
    // Predicated region
    $region10: #{tpu_custom_call.1} parent=1 // pred_check
      _
    $region11: #{tpu_custom_call.1} parent=1 // pred_check_branch
      %31 = sbr.rel (0) target = $region13
    $region12: #{tpu_custom_call.1} parent=1 // pred_region
      %32 = dma.done [#allocation3], 64
    $region13: #{tpu_custom_call.1} parent=1 // pred_fallthru
      _
    // Predicated region
    $region14: #{tpu_custom_call.1} parent=1 // pred_check
      _
    $region15: #{tpu_custom_call.1} parent=1 // pred_check_branch
      %34 = sbr.rel (0) target = $region17
    $region16: #{tpu_custom_call.1} parent=1 // pred_region
      %35 = dma.done [#allocation6], 64
    $region17: #{tpu_custom_call.1} parent=1 // pred_fallthru
      _
    %v36 = vld [vmem:[#allocation2] sm:$0xf]
    %v37 = vld [vmem:[#allocation5] sm:$0xf]
    %v38 = vmul.f32 %v36, %v37
    %v39 = vlaneseq
    %vm40 = vcmp.ge.s32.totalorder %v39, 0
    %vm41 = vcmp.lt.s32.totalorder %v39, 512
    %vm42 = vmand %vm40, %vm41
    %43 = vst.msk [vmem:[#allocation7] sm:$0xf] %vm42, %v38
    // Predicated region
    $region18: #{tpu_custom_call.1} parent=1 // pred_check
      _
    $region19: #{tpu_custom_call.1} parent=1 // pred_check_branch
      %45 = sbr.rel (0) target = $region21
    $region20: #{tpu_custom_call.1} parent=1 // pred_region
      %s47 = ssub.s32 64, 64
      %48 = vsyncadd [#allocation4], %s47
      %s50 = sshll.u32 [#allocation7], 4
      %s51 = int_to_ptr.vmem [resolvable:$true] %s50
      %53 = dma.vmem_to_hbm [thread:$0]  %s51, 64, %s2, [#allocation4]
    $region21: #{tpu_custom_call.1} parent=1 // pred_fallthru
      _
    // Predicated region
    $region22: #{tpu_custom_call.1} parent=1 // pred_check
      _
    $region23: #{tpu_custom_call.1} parent=1 // pred_check_branch
      %55 = sbr.rel (0) target = $region25
    $region24: #{tpu_custom_call.1} parent=1 // pred_region
      %56 = dma.done [#allocation4], 64
    $region25: #{tpu_custom_call.1} parent=1 // pred_fallthru
      _
    %57 = vsyncpa [#allocation3], 1
    %58 = vsyncpa [#allocation6], 1
    %59 = vsyncpa [#allocation4], 1

</llo_original>
